<compile_context>
chip_gen: v7x
topology: tpu7x:2x2x1
jax: 0.10.0
libtpu: 0.0.40
codegen_flags: <defaults>
</compile_context>

<pallas_src>
import jax
import jax.numpy as jnp
from jax.experimental import pallas as pl
from jax.experimental.pallas import tpu as pltpu

LANE = 128          # TPU lane width: pad hidden / action dims to this
DEFAULT_TB = 256    # batch-tile rows (fits easily in VMEM on v5e/v6e/v7x)


def actor_kernel(x_ref, w1_ref, b1_ref, w2_ref, b2_ref, out_ref):
    # fc1: bf16 MXU matmul, f32 accumulation; bias + ReLU in f32 (VPU)
    x = x_ref[...].astype(jnp.bfloat16)
    h = jnp.dot(x, w1_ref[...], preferred_element_type=jnp.float32) + b1_ref[...]
    h = jnp.maximum(h, 0.0)
    # fc2: bf16 MXU matmul, f32 accumulation
    logits = (jnp.dot(h.astype(jnp.bfloat16), w2_ref[...],
                      preferred_element_type=jnp.float32) + b2_ref[...])
    # Numerically-stable softmax over dim=1 in f32. Padded action columns carry
    # a -1e30 bias so exp() underflows to exactly 0 and they contribute nothing.
    m = jnp.max(logits, axis=1, keepdims=True)
    e = jnp.exp(logits - m)
    denom = jnp.sum(e, axis=1, keepdims=True)
    out_ref[...] = (e * pl.reciprocal(denom, approx=True)).astype(out_ref.dtype)


def actor_forward(state, w1, b1, w2, b2, action_dim, *, tb=DEFAULT_TB):
    """state: [B, NUM_STATES] f32; w1/w2 bf16 (lane-padded), b1/b2 f32 (lane-padded)."""
    B, S = state.shape
    H_pad = w1.shape[1]
    A_pad = w2.shape[1]

    # Pad the batch to a multiple of the tile so every grid step is full.
    n_tiles = pl.cdiv(B, tb)
    B_pad = n_tiles * tb
    if B_pad != B:
        state = jnp.pad(state, ((0, B_pad - B), (0, 0)))

    out = pl.pallas_call(
        actor_kernel,
        out_shape=jax.ShapeDtypeStruct((B_pad, A_pad), jnp.float32),
        grid=(n_tiles,),
        in_specs=[
            pl.BlockSpec((tb, S), lambda i: (i, 0)),        # state tile (pipelined)
            pl.BlockSpec((S, H_pad), lambda i: (0, 0)),      # w1 resident
            pl.BlockSpec((1, H_pad), lambda i: (0, 0)),      # b1 resident
            pl.BlockSpec((H_pad, A_pad), lambda i: (0, 0)),  # w2 resident
            pl.BlockSpec((1, A_pad), lambda i: (0, 0)),      # b2 resident
        ],
        out_specs=pl.BlockSpec((tb, A_pad), lambda i: (i, 0)),
        compiler_params=pltpu.CompilerParams(
            dimension_semantics=("parallel",),   # v7x: shard batch grid over 2 TCs
        ),
    )(state, w1, b1, w2, b2)

    # Strip batch padding and the lane padding of the action dimension.
    return out[:B, :action_dim]


def init_params(key, num_states, hidden, action_dim, h_pad=LANE, a_pad=LANE):
    """PyTorch nn.Linear default init (U(-1/sqrt(fan_in), 1/sqrt(fan_in))),
    then lane-pad: hidden 100->128, actions 2->128. Padded w2 rows/cols are 0,
    padded b2 entries are -1e30 so the padded logits vanish under softmax."""
    k1, k2, k3, k4 = jax.random.split(key, 4)
    lim1 = 1.0 / jnp.sqrt(jnp.float32(num_states))
    lim2 = 1.0 / jnp.sqrt(jnp.float32(hidden))
    w1 = jax.random.uniform(k1, (num_states, hidden), jnp.float32, -lim1, lim1)
    b1 = jax.random.uniform(k2, (1, hidden), jnp.float32, -lim1, lim1)
    w2 = jax.random.uniform(k3, (hidden, action_dim), jnp.float32, -lim2, lim2)
    b2 = jax.random.uniform(k4, (1, action_dim), jnp.float32, -lim2, lim2)

    w1p = jnp.zeros((num_states, h_pad), jnp.float32).at[:, :hidden].set(w1)
    b1p = jnp.zeros((1, h_pad), jnp.float32).at[:, :hidden].set(b1)
    w2p = jnp.zeros((h_pad, a_pad), jnp.float32).at[:hidden, :action_dim].set(w2)
    b2p = jnp.full((1, a_pad), -1e30, jnp.float32).at[:, :action_dim].set(b2)

    padded = (w1p.astype(jnp.bfloat16), b1p, w2p.astype(jnp.bfloat16), b2p)
    raw = (w1, b1, w2, b2)
    return padded, raw


def actor_reference(state, w1, b1, w2, b2):
    h = jnp.maximum(state @ w1 + b1, 0.0)
    return jax.nn.softmax(h @ w2 + b2, axis=1)


if __name__ == "__main__":
    # Small shapes consistent with a discrete-control env (e.g. CartPole):
    NUM_STATES = 4
    HIDDEN = 100
    ACTION_DIM = 2
    BATCH = 8

    key = jax.random.PRNGKey(0)
    k_params, k_state = jax.random.split(key)
    (w1, b1, w2, b2), (w1r, b1r, w2r, b2r) = init_params(
        k_params, NUM_STATES, HIDDEN, ACTION_DIM)
    state = jax.random.normal(k_state, (BATCH, NUM_STATES), jnp.float32)

    probs = actor_forward(state, w1, b1, w2, b2, ACTION_DIM)
    probs = jax.block_until_ready(probs)

    # Sanity: shape, rows sum to 1, and close to the pure-f32 JAX reference
    # (loose tolerance because matmul inputs are bf16 and the softmax
    #  denominator uses the EUP approximate reciprocal).
    ref = actor_reference(state, w1r, b1r, w2r, b2r)
    assert probs.shape == (BATCH, ACTION_DIM)
    assert jnp.allclose(jnp.sum(probs, axis=1), 1.0, atol=2e-3)
    assert jnp.allclose(probs, ref, atol=2e-2)

    print("KERNEL_OK")
</pallas_src>

<mosaic_0001>
module attributes {stable_mosaic.version = 11 : i64} {
  func.func @actor_kernel(%arg0: i32, %arg1: memref<256x4xf32, #tpu.memory_space<vmem>>, %arg2: memref<4x128xbf16, #tpu.memory_space<vmem>>, %arg3: memref<1x128xf32, #tpu.memory_space<vmem>>, %arg4: memref<128x128xbf16, #tpu.memory_space<vmem>>, %arg5: memref<1x128xf32, #tpu.memory_space<vmem>>, %arg6: memref<256x128xf32, #tpu.memory_space<vmem>>) attributes {dimension_semantics = [#tpu.dimension_semantics<parallel>], iteration_bounds = array<i64: 1>, scalar_prefetch = 0 : i64, scratch_operands = 0 : i64, tpu.core_type = #tpu.core_type<tc>, window_params = [{transform_indices = @transform_0, window_bounds = array<i64: 256, 4>}, {pipeline_mode = #tpu.pipeline_mode<synchronous>, transform_indices = @transform_1, window_bounds = array<i64: 4, 128>}, {pipeline_mode = #tpu.pipeline_mode<synchronous>, transform_indices = @transform_2, window_bounds = array<i64: 1, 128>}, {pipeline_mode = #tpu.pipeline_mode<synchronous>, transform_indices = @transform_3, window_bounds = array<i64: 128, 128>}, {pipeline_mode = #tpu.pipeline_mode<synchronous>, transform_indices = @transform_4, window_bounds = array<i64: 1, 128>}, {transform_indices = @transform_5, window_bounds = array<i64: 256, 128>}]} {
    %c0 = arith.constant 0 : index
    %c0_0 = arith.constant 0 : index
    %0 = vector.load %arg1[%c0, %c0_0] : memref<256x4xf32, #tpu.memory_space<vmem>>, vector<256x4xf32>
    %1 = arith.truncf %0 : vector<256x4xf32> to vector<256x4xbf16>
    %c0_1 = arith.constant 0 : index
    %c0_2 = arith.constant 0 : index
    %2 = vector.load %arg2[%c0_1, %c0_2] : memref<4x128xbf16, #tpu.memory_space<vmem>>, vector<4x128xbf16>
    %cst = arith.constant dense<0.000000e+00> : vector<256x128xf32>
    %3 = tpu.matmul %1, %2, %cst {dimension_numbers = #tpu.dot_dimension_numbers<[1], [0], [0], [1], [0, 0, 1, 1], [], []>} : vector<256x4xbf16>, vector<4x128xbf16>, vector<256x128xf32> -> vector<256x128xf32>
    %c0_3 = arith.constant 0 : index
    %c0_4 = arith.constant 0 : index
    %4 = vector.load %arg3[%c0_3, %c0_4] : memref<1x128xf32, #tpu.memory_space<vmem>>, vector<1x128xf32>
    %5 = vector.broadcast %4 : vector<1x128xf32> to vector<256x128xf32>
    %6 = arith.addf %3, %5 : vector<256x128xf32>
    %cst_5 = arith.constant 0.000000e+00 : f32
    %7 = vector.broadcast %cst_5 : f32 to vector<256x128xf32>
    %8 = arith.maximumf %6, %7 : vector<256x128xf32>
    %9 = arith.truncf %8 : vector<256x128xf32> to vector<256x128xbf16>
    %c0_6 = arith.constant 0 : index
    %c0_7 = arith.constant 0 : index
    %10 = vector.load %arg4[%c0_6, %c0_7] : memref<128x128xbf16, #tpu.memory_space<vmem>>, vector<128x128xbf16>
    %cst_8 = arith.constant dense<0.000000e+00> : vector<256x128xf32>
    %11 = tpu.matmul %9, %10, %cst_8 {dimension_numbers = #tpu.dot_dimension_numbers<[1], [0], [0], [1], [0, 0, 1, 1], [], []>} : vector<256x128xbf16>, vector<128x128xbf16>, vector<256x128xf32> -> vector<256x128xf32>
    %c0_9 = arith.constant 0 : index
    %c0_10 = arith.constant 0 : index
    %12 = vector.load %arg5[%c0_9, %c0_10] : memref<1x128xf32, #tpu.memory_space<vmem>>, vector<1x128xf32>
    %13 = vector.broadcast %12 : vector<1x128xf32> to vector<256x128xf32>
    %14 = arith.addf %11, %13 : vector<256x128xf32>
    %cst_11 = arith.constant dense<0xFF800000> : vector<256xf32>
    %15 = vector.multi_reduction <maximumf>, %14, %cst_11 [1] : vector<256x128xf32> to vector<256xf32>
    %16 = vector.shape_cast %15 : vector<256xf32> to vector<256x1xf32>
    %17 = vector.broadcast %16 : vector<256x1xf32> to vector<256x128xf32>
    %18 = arith.subf %14, %17 : vector<256x128xf32>
    %19 = math.exp %18 : vector<256x128xf32>
    %cst_12 = arith.constant dense<0.000000e+00> : vector<256xf32>
    %20 = vector.multi_reduction <add>, %19, %cst_12 [1] : vector<256x128xf32> to vector<256xf32>
    %21 = vector.shape_cast %20 : vector<256xf32> to vector<256x1xf32>
    %22 = tpu.reciprocal %21 {approx = true} : vector<256x1xf32> -> vector<256x1xf32>
    %23 = vector.broadcast %22 : vector<256x1xf32> to vector<256x128xf32>
    %24 = arith.mulf %19, %23 : vector<256x128xf32>
    %c0_13 = arith.constant 0 : index
    %c0_14 = arith.constant 0 : index
    %25 = vector.load %arg6[%c0_13, %c0_14] : memref<256x128xf32, #tpu.memory_space<vmem>>, vector<256x128xf32>
    tpu.vector_store %arg6[%c0_13, %c0_14], %24 {strides = array<i32>} : memref<256x128xf32, #tpu.memory_space<vmem>>, vector<256x128xf32>,
    return
  }
  func.func @transform_0(%arg0: i32) -> (i32, i32) {
    %c0_i32 = arith.constant 0 : i32
    %c0_i32_0 = arith.constant 0 : i32
    return %arg0, %c0_i32 : i32, i32
  }
  func.func @transform_1(%arg0: i32) -> (i32, i32) {
    %c0_i32 = arith.constant 0 : i32
    %c0_i32_0 = arith.constant 0 : i32
    %c0_i32_1 = arith.constant 0 : i32
    return %c0_i32, %c0_i32_0 : i32, i32
  }
  func.func @transform_2(%arg0: i32) -> (i32, i32) {
    %c0_i32 = arith.constant 0 : i32
    %c0_i32_0 = arith.constant 0 : i32
    %c0_i32_1 = arith.constant 0 : i32
    return %c0_i32, %c0_i32_0 : i32, i32
  }
  func.func @transform_3(%arg0: i32) -> (i32, i32) {
    %c0_i32 = arith.constant 0 : i32
    %c0_i32_0 = arith.constant 0 : i32
    %c0_i32_1 = arith.constant 0 : i32
    return %c0_i32, %c0_i32_0 : i32, i32
  }
  func.func @transform_4(%arg0: i32) -> (i32, i32) {
    %c0_i32 = arith.constant 0 : i32
    %c0_i32_0 = arith.constant 0 : i32
    %c0_i32_1 = arith.constant 0 : i32
    return %c0_i32, %c0_i32_0 : i32, i32
  }
  func.func @transform_5(%arg0: i32) -> (i32, i32) {
    %c0_i32 = arith.constant 0 : i32
    %c0_i32_0 = arith.constant 0 : i32
    return %arg0, %c0_i32 : i32, i32
  }
}

</mosaic_0001>

<llo_original>
// kernel: tpu_custom_call.1
$region0: #{tpu_custom_call.1}
  #allocation0 [shape = 'u32[]', space=smem, size = 0x4, offset = 0x4, fixed_abs, tag = 'smem constant byte address 0x4 - core index']
  #allocation1 [shape = 'u32[144,128]{1,0:T(1,128)}', space=vmem, size = 0x12000, scoped, tag = 'internal scratch']
  %s0 = inlined_call_operand.vmem [shape: f32[256,4], index: 0, kind: input, shape index: {}]
  %s1 = inlined_call_operand.vmem [shape: bf16[4,128], index: 1, kind: input, shape index: {}]
  %s2 = inlined_call_operand.vmem [shape: f32[1,128], index: 2, kind: input, shape index: {}]
  %s3 = inlined_call_operand.vmem [shape: bf16[128,128], index: 3, kind: input, shape index: {}]
  %s4 = inlined_call_operand.vmem [shape: f32[1,128], index: 4, kind: input, shape index: {}]
  %s5 = inlined_call_operand.hbm [shape: f32[256,128], index: 5, kind: output, shape index: {}]
  %s6 = sld [smem:[#allocation0]]
  $region30: #{tpu_custom_call.1} parent=0
    _
  %s8 = ssub.s32 1, %s6
  %s9 = scalar_select 0, %s8, %s6
  $region1: #{tpu_custom_call.1} parent=0
    #allocation2 [shape = 'u8[131072]{0}', space=vmem, size = 0x20000, scoped, tag = 'output window, operand 0, single buffered']
    #allocation3 [shape = 's32[1]{0}', space=sflag, size = 0x4, scoped, tag = 'scoped memory for tpu_custom_call.1']
    %10 = vsyncpa [#allocation3], 0
    // Predicated region
    $region2: #{tpu_custom_call.1} parent=1 // pred_check
      _
    $region3: #{tpu_custom_call.1} parent=1 // pred_check_branch
      %12 = sbr.rel (0) target = $region5
    $region4: #{tpu_custom_call.1} parent=1 // pred_region
      _
    $region5: #{tpu_custom_call.1} parent=1 // pred_fallthru
      _
    // Predicated region
    $region6: #{tpu_custom_call.1} parent=1 // pred_check
      _
    $region7: #{tpu_custom_call.1} parent=1 // pred_check_branch
      %14 = sbr.rel (0) target = $region9
    $region8: #{tpu_custom_call.1} parent=1 // pred_region
      _
    $region9: #{tpu_custom_call.1} parent=1 // pred_fallthru
      _
    // Predicated region
    $region10: #{tpu_custom_call.1} parent=1 // pred_check
      _
    $region11: #{tpu_custom_call.1} parent=1 // pred_check_branch
      %16 = sbr.rel (0) target = $region13
    $region12: #{tpu_custom_call.1} parent=1 // pred_region
      _
    $region13: #{tpu_custom_call.1} parent=1 // pred_fallthru
      _
    // Predicated region
    $region14: #{tpu_custom_call.1} parent=1 // pred_check
      _
    $region15: #{tpu_custom_call.1} parent=1 // pred_check_branch
      %18 = sbr.rel (0) target = $region17
    $region16: #{tpu_custom_call.1} parent=1 // pred_region
      _
    $region17: #{tpu_custom_call.1} parent=1 // pred_fallthru
      _
    // Predicated region
    $region18: #{tpu_custom_call.1} parent=1 // pred_check
      _
    $region19: #{tpu_custom_call.1} parent=1 // pred_check_branch
      %20 = sbr.rel (0) target = $region21
    $region20: #{tpu_custom_call.1} parent=1 // pred_region
      _
    $region21: #{tpu_custom_call.1} parent=1 // pred_fallthru
      _
    %v22 = vld [vmem:[%s0] sm:$0xff]
    %v23 = vld [vmem:[%s0 + $0x8] sm:$0xff]
    %v24 = vld [vmem:[%s0 + $0x10] sm:$0xff]
    %v25 = vld [vmem:[%s0 + $0x18] sm:$0xff]
    %v26 = vld [vmem:[%s0 + $0x20] sm:$0xff]
    %v27 = vld [vmem:[%s0 + $0x28] sm:$0xff]
    %v28 = vld [vmem:[%s0 + $0x30] sm:$0xff]
    %v29 = vld [vmem:[%s0 + $0x38] sm:$0xff]
    %v30 = vld [vmem:[%s0 + $0x40] sm:$0xff]
    %v31 = vld [vmem:[%s0 + $0x48] sm:$0xff]
    %v32 = vld [vmem:[%s0 + $0x50] sm:$0xff]
    %v33 = vld [vmem:[%s0 + $0x58] sm:$0xff]
    %v34 = vld [vmem:[%s0 + $0x60] sm:$0xff]
    %v35 = vld [vmem:[%s0 + $0x68] sm:$0xff]
    %v36 = vld [vmem:[%s0 + $0x70] sm:$0xff]
    %v37 = vld [vmem:[%s0 + $0x78] sm:$0xff]
    %v38 = vld [vmem:[%s0 + $0x80] sm:$0xff]
    %v39 = vld [vmem:[%s0 + $0x88] sm:$0xff]
    %v40 = vld [vmem:[%s0 + $0x90] sm:$0xff]
    %v41 = vld [vmem:[%s0 + $0x98] sm:$0xff]
    %v42 = vld [vmem:[%s0 + $0xa0] sm:$0xff]
    %v43 = vld [vmem:[%s0 + $0xa8] sm:$0xff]
    %v44 = vld [vmem:[%s0 + $0xb0] sm:$0xff]
    %v45 = vld [vmem:[%s0 + $0xb8] sm:$0xff]
    %v46 = vld [vmem:[%s0 + $0xc0] sm:$0xff]
    %v47 = vld [vmem:[%s0 + $0xc8] sm:$0xff]
    %v48 = vld [vmem:[%s0 + $0xd0] sm:$0xff]
    %v49 = vld [vmem:[%s0 + $0xd8] sm:$0xff]
    %v50 = vld [vmem:[%s0 + $0xe0] sm:$0xff]
    %v51 = vld [vmem:[%s0 + $0xe8] sm:$0xff]
    %v52 = vld [vmem:[%s0 + $0xf0] sm:$0xff]
    %v53 = vld [vmem:[%s0 + $0xf8] sm:$0xff]
    %v54 = vpack.c.bf16 %v23, %v22
    %v55 = vpack.c.bf16 %v25, %v24
    %v56 = vpack.c.bf16 %v27, %v26
    %v57 = vpack.c.bf16 %v29, %v28
    %v58 = vpack.c.bf16 %v31, %v30
    %v59 = vpack.c.bf16 %v33, %v32
    %v60 = vpack.c.bf16 %v35, %v34
    %v61 = vpack.c.bf16 %v37, %v36
    %v62 = vpack.c.bf16 %v39, %v38
    %v63 = vpack.c.bf16 %v41, %v40
    %v64 = vpack.c.bf16 %v43, %v42
    %v65 = vpack.c.bf16 %v45, %v44
    %v66 = vpack.c.bf16 %v47, %v46
    %v67 = vpack.c.bf16 %v49, %v48
    %v68 = vpack.c.bf16 %v51, %v50
    %v69 = vpack.c.bf16 %v53, %v52
    %v70 = vld [vmem:[%s1] sm:$0x3]
    %v71 = vld [vmem:[%s2] sm:$0x1]
    %v73 = vlaneseq
    %v74 = vshrl.u32 %v73, 7
    %v75 = vsub.s32 0, %v74
    %v76 = vrot.slane %v71, %v75
    %vm78 = vcmask 31744
    %v80 = vsel %vm78, %v54, 0
    %v83 = vsel %vm78, %v55, 0
    %v86 = vsel %vm78, %v56, 0
    %v89 = vsel %vm78, %v57, 0
    %v92 = vsel %vm78, %v58, 0
    %v95 = vsel %vm78, %v59, 0
    %v98 = vsel %vm78, %v60, 0
    %v101 = vsel %vm78, %v61, 0
    %v104 = vsel %vm78, %v62, 0
    %v107 = vsel %vm78, %v63, 0
    %v110 = vsel %vm78, %v64, 0
    %v113 = vsel %vm78, %v65, 0
    %v116 = vsel %vm78, %v66, 0
    %v119 = vsel %vm78, %v67, 0
    %v122 = vsel %vm78, %v68, 0
    %v125 = vsel %vm78, %v69, 0
    %vm127 = vcmask 1041408
    %v129 = vsel %vm127, %v70, 0
    %131 = vmatprep.subr.bf16.mxu0 0
    %132 = vmatpush1.bf16.msra.mxu0 %v129
    %133 = vmatprep.subr.bf16.mxu0 0
    %134 = vmatpush1.bf16.msra.mxu0 0
    %135 = vmatprep.subr.bf16.mxu0 0
    %136 = vmatpush1.bf16.msra.mxu0 0
    %137 = vmatprep.subr.bf16.mxu0 0
    %138 = vmatpush1.bf16.msra.mxu0 0
    %139 = vmatprep.subr.bf16.mxu0 0
    %140 = vmatpush1.bf16.msra.mxu0 0
    %141 = vmatprep.subr.bf16.mxu0 0
    %142 = vmatpush1.bf16.msra.mxu0 0
    %143 = vmatprep.subr.bf16.mxu0 0
    %144 = vmatpush1.bf16.msra.mxu0 0
    %145 = vmatprep.subr.bf16.mxu0 0
    %146 = vmatpush1.bf16.msra.mxu0 0
    %147 = vmatprep.subr.bf16.mxu0 0
    %148 = vmatpush1.bf16.msra.mxu0 0
    %149 = vmatprep.subr.bf16.mxu0 0
    %150 = vmatpush1.bf16.msra.mxu0 0
    %151 = vmatprep.subr.bf16.mxu0 0
    %152 = vmatpush1.bf16.msra.mxu0 0
    %153 = vmatprep.subr.bf16.mxu0 0
    %154 = vmatpush1.bf16.msra.mxu0 0
    %155 = vmatprep.subr.bf16.mxu0 0
    %156 = vmatpush1.bf16.msra.mxu0 0
    %157 = vmatprep.subr.bf16.mxu0 0
    %158 = vmatpush1.bf16.msra.mxu0 0
    %159 = vmatprep.subr.bf16.mxu0 0
    %160 = vmatpush1.bf16.msra.mxu0 0
    %161 = vmatprep.subr.bf16.mxu0 0
    %162 = vmatpush1.bf16.msra.mxu0 0
    %163 = vmatprep.mubr.bf16.mxu0 0
    %164 = vmatmul.mubr.bf16.gmra.mrb[0].mxu0 %v80
    %v165 = vpop.f32.mrb[0].mxu0
    %v166 = vadd.f32 %v76, %v165
    %v167 = vpop.f32.mrb[0].mxu0
    %v168 = vpop.f32.mrb[0].mxu0
    %v169 = vadd.f32 %v76, %v168
    %v170 = vpop.f32.mrb[0].mxu0
    %171 = vmatprep.mubr.bf16.mxu0 0
    %172 = vmatmul.mubr.bf16.gmra.mrb[0].mxu0 %v83
    %v173 = vpop.f32.mrb[0].mxu0
    %v174 = vadd.f32 %v76, %v173
    %v175 = vpop.f32.mrb[0].mxu0
    %v176 = vpop.f32.mrb[0].mxu0
    %v177 = vadd.f32 %v76, %v176
    %v178 = vpop.f32.mrb[0].mxu0
    %179 = vmatprep.mubr.bf16.mxu0 0
    %180 = vmatmul.mubr.bf16.gmra.mrb[0].mxu0 %v86
    %v181 = vpop.f32.mrb[0].mxu0
    %v182 = vadd.f32 %v76, %v181
    %v183 = vpop.f32.mrb[0].mxu0
    %v184 = vpop.f32.mrb[0].mxu0
    %v185 = vadd.f32 %v76, %v184
    %v186 = vpop.f32.mrb[0].mxu0
    %187 = vmatprep.mubr.bf16.mxu0 0
    %188 = vmatmul.mubr.bf16.gmra.mrb[0].mxu0 %v89
    %v189 = vpop.f32.mrb[0].mxu0
    %v190 = vadd.f32 %v76, %v189
    %v191 = vpop.f32.mrb[0].mxu0
    %v192 = vpop.f32.mrb[0].mxu0
    %v193 = vadd.f32 %v76, %v192
    %v194 = vpop.f32.mrb[0].mxu0
    %195 = vmatprep.mubr.bf16.mxu0 0
    %196 = vmatmul.mubr.bf16.gmra.mrb[0].mxu0 %v92
    %v197 = vpop.f32.mrb[0].mxu0
    %v198 = vadd.f32 %v76, %v197
    %v199 = vpop.f32.mrb[0].mxu0
    %v200 = vpop.f32.mrb[0].mxu0
    %v201 = vadd.f32 %v76, %v200
    %v202 = vpop.f32.mrb[0].mxu0
    %203 = vmatprep.mubr.bf16.mxu0 0
    %204 = vmatmul.mubr.bf16.gmra.mrb[0].mxu0 %v95
    %v205 = vpop.f32.mrb[0].mxu0
    %v206 = vadd.f32 %v76, %v205
    %v207 = vpop.f32.mrb[0].mxu0
    %v208 = vpop.f32.mrb[0].mxu0
    %v209 = vadd.f32 %v76, %v208
    %v210 = vpop.f32.mrb[0].mxu0
    %211 = vmatprep.mubr.bf16.mxu0 0
    %212 = vmatmul.mubr.bf16.gmra.mrb[0].mxu0 %v98
    %v213 = vpop.f32.mrb[0].mxu0
    %v214 = vadd.f32 %v76, %v213
    %v215 = vpop.f32.mrb[0].mxu0
    %v216 = vpop.f32.mrb[0].mxu0
    %v217 = vadd.f32 %v76, %v216
    %v218 = vpop.f32.mrb[0].mxu0
    %219 = vmatprep.mubr.bf16.mxu0 0
    %220 = vmatmul.mubr.bf16.gmra.mrb[0].mxu0 %v101
    %v221 = vpop.f32.mrb[0].mxu0
    %v222 = vadd.f32 %v76, %v221
    %v223 = vpop.f32.mrb[0].mxu0
    %v224 = vpop.f32.mrb[0].mxu0
    %v225 = vadd.f32 %v76, %v224
    %v226 = vpop.f32.mrb[0].mxu0
    %227 = vmatprep.mubr.bf16.mxu0 0
    %228 = vmatmul.mubr.bf16.gmra.mrb[0].mxu0 %v104
    %v229 = vpop.f32.mrb[0].mxu0
    %v230 = vadd.f32 %v76, %v229
    %v231 = vpop.f32.mrb[0].mxu0
    %v232 = vpop.f32.mrb[0].mxu0
    %v233 = vadd.f32 %v76, %v232
    %v234 = vpop.f32.mrb[0].mxu0
    %235 = vmatprep.mubr.bf16.mxu0 0
    %236 = vmatmul.mubr.bf16.gmra.mrb[0].mxu0 %v107
    %v237 = vpop.f32.mrb[0].mxu0
    %v238 = vadd.f32 %v76, %v237
    %v239 = vpop.f32.mrb[0].mxu0
    %v240 = vpop.f32.mrb[0].mxu0
    %v241 = vadd.f32 %v76, %v240
    %v242 = vpop.f32.mrb[0].mxu0
    %243 = vmatprep.mubr.bf16.mxu0 0
    %244 = vmatmul.mubr.bf16.gmra.mrb[0].mxu0 %v110
    %v245 = vpop.f32.mrb[0].mxu0
    %v246 = vadd.f32 %v76, %v245
    %v247 = vpop.f32.mrb[0].mxu0
    %v248 = vpop.f32.mrb[0].mxu0
    %v249 = vadd.f32 %v76, %v248
    %v250 = vpop.f32.mrb[0].mxu0
    %251 = vmatprep.mubr.bf16.mxu0 0
    %252 = vmatmul.mubr.bf16.gmra.mrb[0].mxu0 %v113
    %v253 = vpop.f32.mrb[0].mxu0
    %v254 = vadd.f32 %v76, %v253
    %v255 = vpop.f32.mrb[0].mxu0
    %v256 = vpop.f32.mrb[0].mxu0
    %v257 = vadd.f32 %v76, %v256
    %v258 = vpop.f32.mrb[0].mxu0
    %259 = vmatprep.mubr.bf16.mxu0 0
    %260 = vmatmul.mubr.bf16.gmra.mrb[0].mxu0 %v116
    %v261 = vpop.f32.mrb[0].mxu0
    %v262 = vadd.f32 %v76, %v261
    %v263 = vpop.f32.mrb[0].mxu0
    %v264 = vpop.f32.mrb[0].mxu0
    %v265 = vadd.f32 %v76, %v264
    %v266 = vpop.f32.mrb[0].mxu0
    %267 = vmatprep.mubr.bf16.mxu0 0
    %268 = vmatmul.mubr.bf16.gmra.mrb[0].mxu0 %v119
    %v269 = vpop.f32.mrb[0].mxu0
    %v270 = vadd.f32 %v76, %v269
    %v271 = vpop.f32.mrb[0].mxu0
    %v272 = vpop.f32.mrb[0].mxu0
    %v273 = vadd.f32 %v76, %v272
    %v274 = vpop.f32.mrb[0].mxu0
    %275 = vmatprep.mubr.bf16.mxu0 0
    %276 = vmatmul.mubr.bf16.gmra.mrb[0].mxu0 %v122
    %v277 = vpop.f32.mrb[0].mxu0
    %v278 = vadd.f32 %v76, %v277
    %v279 = vpop.f32.mrb[0].mxu0
    %v280 = vpop.f32.mrb[0].mxu0
    %v281 = vadd.f32 %v76, %v280
    %v282 = vpop.f32.mrb[0].mxu0
    %283 = vmatprep.mubr.bf16.mxu0 0
    %284 = vmatmul.mubr.bf16.gmra.mrb[0].mxu0 %v125
    %v285 = vpop.f32.mrb[0].mxu0
    %v286 = vadd.f32 %v76, %v285
    %v287 = vpop.f32.mrb[0].mxu0
    %v288 = vpop.f32.mrb[0].mxu0
    %v289 = vadd.f32 %v76, %v288
    %v290 = vpop.f32.mrb[0].mxu0
    %291 = vdwg.mxu0
    %v292 = vmax.f32 %v166, 0.0
    %v293 = vmax.f32 %v169, 0.0
    %v294 = vmax.f32 %v174, 0.0
    %v295 = vmax.f32 %v177, 0.0
    %v296 = vmax.f32 %v182, 0.0
    %v297 = vmax.f32 %v185, 0.0
    %v298 = vmax.f32 %v190, 0.0
    %v299 = vmax.f32 %v193, 0.0
    %v300 = vmax.f32 %v198, 0.0
    %v301 = vmax.f32 %v201, 0.0
    %v302 = vmax.f32 %v206, 0.0
    %v303 = vmax.f32 %v209, 0.0
    %v304 = vmax.f32 %v214, 0.0
    %v305 = vmax.f32 %v217, 0.0
    %v306 = vmax.f32 %v222, 0.0
    %v307 = vmax.f32 %v225, 0.0
    %v308 = vmax.f32 %v230, 0.0
    %v309 = vmax.f32 %v233, 0.0
    %v310 = vmax.f32 %v238, 0.0
    %v311 = vmax.f32 %v241, 0.0
    %v312 = vmax.f32 %v246, 0.0
    %v313 = vmax.f32 %v249, 0.0
    %v314 = vmax.f32 %v254, 0.0
    %v315 = vmax.f32 %v257, 0.0
    %v316 = vmax.f32 %v262, 0.0
    %v317 = vmax.f32 %v265, 0.0
    %v318 = vmax.f32 %v270, 0.0
    %v319 = vmax.f32 %v273, 0.0
    %v320 = vmax.f32 %v278, 0.0
    %v321 = vmax.f32 %v281, 0.0
    %v322 = vmax.f32 %v286, 0.0
    %v323 = vmax.f32 %v289, 0.0
    %v324 = vpack.c.bf16 %v293, %v292
    %v325 = vpack.c.bf16 %v295, %v294
    %v326 = vpack.c.bf16 %v297, %v296
    %v327 = vpack.c.bf16 %v299, %v298
    %v328 = vpack.c.bf16 %v301, %v300
    %v329 = vpack.c.bf16 %v303, %v302
    %v330 = vpack.c.bf16 %v305, %v304
    %v331 = vpack.c.bf16 %v307, %v306
    %v332 = vpack.c.bf16 %v309, %v308
    %v333 = vpack.c.bf16 %v311, %v310
    %v334 = vpack.c.bf16 %v313, %v312
    %v335 = vpack.c.bf16 %v315, %v314
    %v336 = vpack.c.bf16 %v317, %v316
    %v337 = vpack.c.bf16 %v319, %v318
    %v338 = vpack.c.bf16 %v321, %v320
    %v339 = vpack.c.bf16 %v323, %v322
    %v340 = vld [vmem:[%s3] sm:$0xf]
    %v341 = vld [vmem:[%s3 + $0x4] sm:$0xf]
    %v342 = vld [vmem:[%s3 + $0x8] sm:$0xf]
    %v343 = vld [vmem:[%s3 + $0xc] sm:$0xf]
    %v344 = vld [vmem:[%s3 + $0x10] sm:$0xf]
    %v345 = vld [vmem:[%s3 + $0x14] sm:$0xf]
    %v346 = vld [vmem:[%s3 + $0x18] sm:$0xf]
    %v347 = vld [vmem:[%s3 + $0x1c] sm:$0xf]
    %v348 = vld [vmem:[%s3 + $0x20] sm:$0xf]
    %v349 = vld [vmem:[%s3 + $0x24] sm:$0xf]
    %v350 = vld [vmem:[%s3 + $0x28] sm:$0xf]
    %v351 = vld [vmem:[%s3 + $0x2c] sm:$0xf]
    %v352 = vld [vmem:[%s3 + $0x30] sm:$0xf]
    %v353 = vld [vmem:[%s3 + $0x34] sm:$0xf]
    %v354 = vld [vmem:[%s3 + $0x38] sm:$0xf]
    %v355 = vld [vmem:[%s3 + $0x3c] sm:$0xf]
    %v356 = vld [vmem:[%s4] sm:$0x1]
    %v358 = vlaneseq
    %v359 = vshrl.u32 %v358, 7
    %v360 = vsub.s32 0, %v359
    %v361 = vrot.slane %v356, %v360
    %v379 = vunpack.c.l.b16 %v340
    %v380 = vunpack.c.l.b16 %v341
    %v381 = vunpack.c.l.b16 %v342
    %v382 = vunpack.c.l.b16 %v343
    %v383 = vunpack.c.l.b16 %v344
    %v384 = vunpack.c.l.b16 %v345
    %v385 = vunpack.c.l.b16 %v346
    %v386 = vunpack.c.l.b16 %v347
    %v387 = vunpack.c.l.b16 %v348
    %v388 = vunpack.c.l.b16 %v349
    %v389 = vunpack.c.l.b16 %v350
    %v390 = vunpack.c.l.b16 %v351
    %v391 = vunpack.c.l.b16 %v352
    %v392 = vunpack.c.l.b16 %v353
    %v393 = vunpack.c.l.b16 %v354
    %v394 = vunpack.c.l.b16 %v355
    %v395 = vpack.c.b16 %v380, %v379
    %v396 = vpack.c.b16 %v382, %v381
    %v397 = vpack.c.b16 %v384, %v383
    %v398 = vpack.c.b16 %v386, %v385
    %v399 = vpack.c.b16 %v388, %v387
    %v400 = vpack.c.b16 %v390, %v389
    %v401 = vpack.c.b16 %v392, %v391
    %v402 = vpack.c.b16 %v394, %v393
    %411 = vmatprep.subr.bf16.mxu0 0
    %412 = vmatpush1.bf16.msra.mxu0 %v395
    %413 = vmatprep.subr.bf16.mxu0 0
    %414 = vmatpush1.bf16.msra.mxu0 %v396
    %415 = vmatprep.subr.bf16.mxu0 0
    %416 = vmatpush1.bf16.msra.mxu0 %v397
    %417 = vmatprep.subr.bf16.mxu0 0
    %418 = vmatpush1.bf16.msra.mxu0 %v398
    %419 = vmatprep.subr.bf16.mxu0 0
    %420 = vmatpush1.bf16.msra.mxu0 %v399
    %421 = vmatprep.subr.bf16.mxu0 0
    %422 = vmatpush1.bf16.msra.mxu0 %v400
    %423 = vmatprep.subr.bf16.mxu0 0
    %424 = vmatpush1.bf16.msra.mxu0 %v401
    %425 = vmatprep.subr.bf16.mxu0 0
    %426 = vmatpush1.bf16.msra.mxu0 %v402
    %427 = vmatprep.subr.bf16.mxu0 0
    %428 = vmatpush1.bf16.msra.mxu0 0
    %429 = vmatprep.subr.bf16.mxu0 0
    %430 = vmatpush1.bf16.msra.mxu0 0
    %431 = vmatprep.subr.bf16.mxu0 0
    %432 = vmatpush1.bf16.msra.mxu0 0
    %433 = vmatprep.subr.bf16.mxu0 0
    %434 = vmatpush1.bf16.msra.mxu0 0
    %435 = vmatprep.subr.bf16.mxu0 0
    %436 = vmatpush1.bf16.msra.mxu0 0
    %437 = vmatprep.subr.bf16.mxu0 0
    %438 = vmatpush1.bf16.msra.mxu0 0
    %439 = vmatprep.subr.bf16.mxu0 0
    %440 = vmatpush1.bf16.msra.mxu0 0
    %441 = vmatprep.subr.bf16.mxu0 0
    %442 = vmatpush1.bf16.msra.mxu0 0
    %443 = vmatprep.mubr.bf16.mxu0 0
    %444 = vmatmul.mubr.bf16.gmra.mrb[0].mxu0 %v324
    %v445 = vpop.f32.mrb[0].mxu0
    %v446 = vadd.f32 %v361, %v445
    %v447 = vpop.f32.mrb[0].mxu0
    %v448 = vpop.f32.mrb[0].mxu0
    %v449 = vadd.f32 %v361, %v448
    %v450 = vpop.f32.mrb[0].mxu0
    %451 = vmatprep.mubr.bf16.mxu0 0
    %452 = vmatmul.mubr.bf16.gmra.mrb[0].mxu0 %v325
    %v453 = vpop.f32.mrb[0].mxu0
    %v454 = vadd.f32 %v361, %v453
    %v455 = vpop.f32.mrb[0].mxu0
    %v456 = vpop.f32.mrb[0].mxu0
    %v457 = vadd.f32 %v361, %v456
    %v458 = vpop.f32.mrb[0].mxu0
    %459 = vmatprep.mubr.bf16.mxu0 0
    %460 = vmatmul.mubr.bf16.gmra.mrb[0].mxu0 %v326
    %v461 = vpop.f32.mrb[0].mxu0
    %v462 = vadd.f32 %v361, %v461
    %v463 = vpop.f32.mrb[0].mxu0
    %v464 = vpop.f32.mrb[0].mxu0
    %v465 = vadd.f32 %v361, %v464
    %v466 = vpop.f32.mrb[0].mxu0
    %467 = vmatprep.mubr.bf16.mxu0 0
    %468 = vmatmul.mubr.bf16.gmra.mrb[0].mxu0 %v327
    %v469 = vpop.f32.mrb[0].mxu0
    %v470 = vadd.f32 %v361, %v469
    %v471 = vpop.f32.mrb[0].mxu0
    %v472 = vpop.f32.mrb[0].mxu0
    %v473 = vadd.f32 %v361, %v472
    %v474 = vpop.f32.mrb[0].mxu0
    %475 = vmatprep.mubr.bf16.mxu0 0
    %476 = vmatmul.mubr.bf16.gmra.mrb[0].mxu0 %v328
    %v477 = vpop.f32.mrb[0].mxu0
    %v478 = vadd.f32 %v361, %v477
    %v479 = vpop.f32.mrb[0].mxu0
    %v480 = vpop.f32.mrb[0].mxu0
    %v481 = vadd.f32 %v361, %v480
    %v482 = vpop.f32.mrb[0].mxu0
    %483 = vmatprep.mubr.bf16.mxu0 0
    %484 = vmatmul.mubr.bf16.gmra.mrb[0].mxu0 %v329
    %v485 = vpop.f32.mrb[0].mxu0
    %v486 = vadd.f32 %v361, %v485
    %v487 = vpop.f32.mrb[0].mxu0
    %v488 = vpop.f32.mrb[0].mxu0
    %v489 = vadd.f32 %v361, %v488
    %v490 = vpop.f32.mrb[0].mxu0
    %491 = vmatprep.mubr.bf16.mxu0 0
    %492 = vmatmul.mubr.bf16.gmra.mrb[0].mxu0 %v330
    %v493 = vpop.f32.mrb[0].mxu0
    %v494 = vadd.f32 %v361, %v493
    %v495 = vpop.f32.mrb[0].mxu0
    %v496 = vpop.f32.mrb[0].mxu0
    %v497 = vadd.f32 %v361, %v496
    %v498 = vpop.f32.mrb[0].mxu0
    %499 = vmatprep.mubr.bf16.mxu0 0
    %500 = vmatmul.mubr.bf16.gmra.mrb[0].mxu0 %v331
    %v501 = vpop.f32.mrb[0].mxu0
    %v502 = vadd.f32 %v361, %v501
    %v503 = vpop.f32.mrb[0].mxu0
    %v504 = vpop.f32.mrb[0].mxu0
    %v505 = vadd.f32 %v361, %v504
    %v506 = vpop.f32.mrb[0].mxu0
    %507 = vmatprep.mubr.bf16.mxu0 0
    %508 = vmatmul.mubr.bf16.gmra.mrb[0].mxu0 %v332
    %v509 = vpop.f32.mrb[0].mxu0
    %v510 = vadd.f32 %v361, %v509
    %v511 = vpop.f32.mrb[0].mxu0
    %v512 = vpop.f32.mrb[0].mxu0
    %v513 = vadd.f32 %v361, %v512
    %v514 = vpop.f32.mrb[0].mxu0
    %515 = vmatprep.mubr.bf16.mxu0 0
    %516 = vmatmul.mubr.bf16.gmra.mrb[0].mxu0 %v333
    %v517 = vpop.f32.mrb[0].mxu0
    %v518 = vadd.f32 %v361, %v517
    %v519 = vpop.f32.mrb[0].mxu0
    %v520 = vpop.f32.mrb[0].mxu0
    %v521 = vadd.f32 %v361, %v520
    %v522 = vpop.f32.mrb[0].mxu0
    %523 = vmatprep.mubr.bf16.mxu0 0
    %524 = vmatmul.mubr.bf16.gmra.mrb[0].mxu0 %v334
    %v525 = vpop.f32.mrb[0].mxu0
    %v526 = vadd.f32 %v361, %v525
    %v527 = vpop.f32.mrb[0].mxu0
    %v528 = vpop.f32.mrb[0].mxu0
    %v529 = vadd.f32 %v361, %v528
    %v530 = vpop.f32.mrb[0].mxu0
    %531 = vmatprep.mubr.bf16.mxu0 0
    %532 = vmatmul.mubr.bf16.gmra.mrb[0].mxu0 %v335
    %v533 = vpop.f32.mrb[0].mxu0
    %v534 = vadd.f32 %v361, %v533
    %v535 = vpop.f32.mrb[0].mxu0
    %v536 = vpop.f32.mrb[0].mxu0
    %v537 = vadd.f32 %v361, %v536
    %v538 = vpop.f32.mrb[0].mxu0
    %539 = vmatprep.mubr.bf16.mxu0 0
    %540 = vmatmul.mubr.bf16.gmra.mrb[0].mxu0 %v336
    %v541 = vpop.f32.mrb[0].mxu0
    %v542 = vadd.f32 %v361, %v541
    %v543 = vpop.f32.mrb[0].mxu0
    %v544 = vpop.f32.mrb[0].mxu0
    %v545 = vadd.f32 %v361, %v544
    %v546 = vpop.f32.mrb[0].mxu0
    %547 = vmatprep.mubr.bf16.mxu0 0
    %548 = vmatmul.mubr.bf16.gmra.mrb[0].mxu0 %v337
    %v549 = vpop.f32.mrb[0].mxu0
    %v550 = vadd.f32 %v361, %v549
    %v551 = vpop.f32.mrb[0].mxu0
    %v552 = vpop.f32.mrb[0].mxu0
    %v553 = vadd.f32 %v361, %v552
    %v554 = vpop.f32.mrb[0].mxu0
    %555 = vmatprep.mubr.bf16.mxu0 0
    %556 = vmatmul.mubr.bf16.gmra.mrb[0].mxu0 %v338
    %v557 = vpop.f32.mrb[0].mxu0
    %v558 = vadd.f32 %v361, %v557
    %v559 = vpop.f32.mrb[0].mxu0
    %v560 = vpop.f32.mrb[0].mxu0
    %v561 = vadd.f32 %v361, %v560
    %v562 = vpop.f32.mrb[0].mxu0
    %563 = vmatprep.mubr.bf16.mxu0 0
    %564 = vmatmul.mubr.bf16.gmra.mrb[0].mxu0 %v339
    %v565 = vpop.f32.mrb[0].mxu0
    %v566 = vadd.f32 %v361, %v565
    %v567 = vpop.f32.mrb[0].mxu0
    %v568 = vpop.f32.mrb[0].mxu0
    %v569 = vadd.f32 %v361, %v568
    %v570 = vpop.f32.mrb[0].mxu0
    %571 = vdwg.mxu0
    %572 = vmax.xlane.f32.xlu0 %v446
    %v573 = vpop.xlane.xlu0 %572
    %574 = vmax.xlane.f32.xlu0 %v449
    %v575 = vpop.xlane.xlu0 %574
    %576 = vmax.xlane.f32.xlu0 %v454
    %v577 = vpop.xlane.xlu0 %576
    %578 = vmax.xlane.f32.xlu0 %v457
    %v579 = vpop.xlane.xlu0 %578
    %580 = vmax.xlane.f32.xlu0 %v462
    %v581 = vpop.xlane.xlu0 %580
    %582 = vmax.xlane.f32.xlu0 %v465
    %v583 = vpop.xlane.xlu0 %582
    %584 = vmax.xlane.f32.xlu0 %v470
    %v585 = vpop.xlane.xlu0 %584
    %586 = vmax.xlane.f32.xlu0 %v473
    %v587 = vpop.xlane.xlu0 %586
    %588 = vmax.xlane.f32.xlu0 %v478
    %v589 = vpop.xlane.xlu0 %588
    %590 = vmax.xlane.f32.xlu0 %v481
    %v591 = vpop.xlane.xlu0 %590
    %592 = vmax.xlane.f32.xlu0 %v486
    %v593 = vpop.xlane.xlu0 %592
    %594 = vmax.xlane.f32.xlu0 %v489
    %v595 = vpop.xlane.xlu0 %594
    %596 = vmax.xlane.f32.xlu0 %v494
    %v597 = vpop.xlane.xlu0 %596
    %598 = vmax.xlane.f32.xlu0 %v497
    %v599 = vpop.xlane.xlu0 %598
    %600 = vmax.xlane.f32.xlu0 %v502
    %v601 = vpop.xlane.xlu0 %600
    %602 = vmax.xlane.f32.xlu0 %v505
    %v603 = vpop.xlane.xlu0 %602
    %604 = vmax.xlane.f32.xlu0 %v510
    %v605 = vpop.xlane.xlu0 %604
    %606 = vmax.xlane.f32.xlu0 %v513
    %v607 = vpop.xlane.xlu0 %606
    %608 = vmax.xlane.f32.xlu0 %v518
    %v609 = vpop.xlane.xlu0 %608
    %610 = vmax.xlane.f32.xlu0 %v521
    %v611 = vpop.xlane.xlu0 %610
    %612 = vmax.xlane.f32.xlu0 %v526
    %v613 = vpop.xlane.xlu0 %612
    %614 = vmax.xlane.f32.xlu0 %v529
    %v615 = vpop.xlane.xlu0 %614
    %616 = vmax.xlane.f32.xlu0 %v534
    %v617 = vpop.xlane.xlu0 %616
    %618 = vmax.xlane.f32.xlu0 %v537
    %v619 = vpop.xlane.xlu0 %618
    %620 = vmax.xlane.f32.xlu0 %v542
    %v621 = vpop.xlane.xlu0 %620
    %622 = vmax.xlane.f32.xlu0 %v545
    %v623 = vpop.xlane.xlu0 %622
    %624 = vmax.xlane.f32.xlu0 %v550
    %v625 = vpop.xlane.xlu0 %624
    %626 = vmax.xlane.f32.xlu0 %v553
    %v627 = vpop.xlane.xlu0 %626
    %628 = vmax.xlane.f32.xlu0 %v558
    %v629 = vpop.xlane.xlu0 %628
    %630 = vmax.xlane.f32.xlu0 %v561
    %v631 = vpop.xlane.xlu0 %630
    %632 = vmax.xlane.f32.xlu0 %v566
    %v633 = vpop.xlane.xlu0 %632
    %634 = vmax.xlane.f32.xlu0 %v569
    %v635 = vpop.xlane.xlu0 %634
    %v636 = vsub.f32 %v446, %v573
    %v637 = vsub.f32 %v449, %v575
    %v638 = vsub.f32 %v454, %v577
    %v639 = vsub.f32 %v457, %v579
    %v640 = vsub.f32 %v462, %v581
    %v641 = vsub.f32 %v465, %v583
    %v642 = vsub.f32 %v470, %v585
    %v643 = vsub.f32 %v473, %v587
    %v644 = vsub.f32 %v478, %v589
    %v645 = vsub.f32 %v481, %v591
    %v646 = vsub.f32 %v486, %v593
    %v647 = vsub.f32 %v489, %v595
    %v648 = vsub.f32 %v494, %v597
    %v649 = vsub.f32 %v497, %v599
    %v650 = vsub.f32 %v502, %v601
    %v651 = vsub.f32 %v505, %v603
    %v652 = vsub.f32 %v510, %v605
    %v653 = vsub.f32 %v513, %v607
    %v654 = vsub.f32 %v518, %v609
    %v655 = vsub.f32 %v521, %v611
    %v656 = vsub.f32 %v526, %v613
    %v657 = vsub.f32 %v529, %v615
    %v658 = vsub.f32 %v534, %v617
    %v659 = vsub.f32 %v537, %v619
    %v660 = vsub.f32 %v542, %v621
    %v661 = vsub.f32 %v545, %v623
    %v662 = vsub.f32 %v550, %v625
    %v663 = vsub.f32 %v553, %v627
    %v664 = vsub.f32 %v558, %v629
    %v665 = vsub.f32 %v561, %v631
    %v666 = vsub.f32 %v566, %v633
    %v667 = vsub.f32 %v569, %v635
    %v668 = vmul.f32 %v636, 1.442695
    %v669 = vpow.pop %v668
    %v670 = vmul.f32 %v637, 1.442695
    %v671 = vpow.pop %v670
    %v672 = vmul.f32 %v638, 1.442695
    %v673 = vpow.pop %v672
    %v674 = vmul.f32 %v639, 1.442695
    %v675 = vpow.pop %v674
    %v676 = vmul.f32 %v640, 1.442695
    %v677 = vpow.pop %v676
    %v678 = vmul.f32 %v641, 1.442695
    %v679 = vpow.pop %v678
    %v680 = vmul.f32 %v642, 1.442695
    %v681 = vpow.pop %v680
    %v682 = vmul.f32 %v643, 1.442695
    %v683 = vpow.pop %v682
    %v684 = vmul.f32 %v644, 1.442695
    %v685 = vpow.pop %v684
    %v686 = vmul.f32 %v645, 1.442695
    %v687 = vpow.pop %v686
    %v688 = vmul.f32 %v646, 1.442695
    %v689 = vpow.pop %v688
    %v690 = vmul.f32 %v647, 1.442695
    %v691 = vpow.pop %v690
    %v692 = vmul.f32 %v648, 1.442695
    %v693 = vpow.pop %v692
    %v694 = vmul.f32 %v649, 1.442695
    %v695 = vpow.pop %v694
    %v696 = vmul.f32 %v650, 1.442695
    %v697 = vpow.pop %v696
    %v698 = vmul.f32 %v651, 1.442695
    %v699 = vpow.pop %v698
    %v700 = vmul.f32 %v652, 1.442695
    %v701 = vpow.pop %v700
    %v702 = vmul.f32 %v653, 1.442695
    %v703 = vpow.pop %v702
    %v704 = vmul.f32 %v654, 1.442695
    %v705 = vpow.pop %v704
    %v706 = vmul.f32 %v655, 1.442695
    %v707 = vpow.pop %v706
    %v708 = vmul.f32 %v656, 1.442695
    %v709 = vpow.pop %v708
    %v710 = vmul.f32 %v657, 1.442695
    %v711 = vpow.pop %v710
    %v712 = vmul.f32 %v658, 1.442695
    %v713 = vpow.pop %v712
    %v714 = vmul.f32 %v659, 1.442695
    %v715 = vpow.pop %v714
    %v716 = vmul.f32 %v660, 1.442695
    %v717 = vpow.pop %v716
    %v718 = vmul.f32 %v661, 1.442695
    %v719 = vpow.pop %v718
    %v720 = vmul.f32 %v662, 1.442695
    %v721 = vpow.pop %v720
    %v722 = vmul.f32 %v663, 1.442695
    %v723 = vpow.pop %v722
    %v724 = vmul.f32 %v664, 1.442695
    %v725 = vpow.pop %v724
    %v726 = vmul.f32 %v665, 1.442695
    %v727 = vpow.pop %v726
    %v728 = vmul.f32 %v666, 1.442695
    %v729 = vpow.pop %v728
    %v730 = vmul.f32 %v667, 1.442695
    %v731 = vpow.pop %v730
    %732 = vadd.xlane.f32.xlu0 %v669
    %v733 = vpop.xlane.xlu0 %732
    %734 = vadd.xlane.f32.xlu0 %v671
    %v735 = vpop.xlane.xlu0 %734
    %736 = vadd.xlane.f32.xlu0 %v673
    %v737 = vpop.xlane.xlu0 %736
    %738 = vadd.xlane.f32.xlu0 %v675
    %v739 = vpop.xlane.xlu0 %738
    %740 = vadd.xlane.f32.xlu0 %v677
    %v741 = vpop.xlane.xlu0 %740
    %742 = vadd.xlane.f32.xlu0 %v679
    %v743 = vpop.xlane.xlu0 %742
    %744 = vadd.xlane.f32.xlu0 %v681
    %v745 = vpop.xlane.xlu0 %744
    %746 = vadd.xlane.f32.xlu0 %v683
    %v747 = vpop.xlane.xlu0 %746
    %748 = vadd.xlane.f32.xlu0 %v685
    %v749 = vpop.xlane.xlu0 %748
    %750 = vadd.xlane.f32.xlu0 %v687
    %v751 = vpop.xlane.xlu0 %750
    %752 = vadd.xlane.f32.xlu0 %v689
    %v753 = vpop.xlane.xlu0 %752
    %754 = vadd.xlane.f32.xlu0 %v691
    %v755 = vpop.xlane.xlu0 %754
    %756 = vadd.xlane.f32.xlu0 %v693
    %v757 = vpop.xlane.xlu0 %756
    %758 = vadd.xlane.f32.xlu0 %v695
    %v759 = vpop.xlane.xlu0 %758
    %760 = vadd.xlane.f32.xlu0 %v697
    %v761 = vpop.xlane.xlu0 %760
    %762 = vadd.xlane.f32.xlu0 %v699
    %v763 = vpop.xlane.xlu0 %762
    %764 = vadd.xlane.f32.xlu0 %v701
    %v765 = vpop.xlane.xlu0 %764
    %766 = vadd.xlane.f32.xlu0 %v703
    %v767 = vpop.xlane.xlu0 %766
    %768 = vadd.xlane.f32.xlu0 %v705
    %v769 = vpop.xlane.xlu0 %768
    %770 = vadd.xlane.f32.xlu0 %v707
    %v771 = vpop.xlane.xlu0 %770
    %772 = vadd.xlane.f32.xlu0 %v709
    %v773 = vpop.xlane.xlu0 %772
    %774 = vadd.xlane.f32.xlu0 %v711
    %v775 = vpop.xlane.xlu0 %774
    %776 = vadd.xlane.f32.xlu0 %v713
    %v777 = vpop.xlane.xlu0 %776
    %778 = vadd.xlane.f32.xlu0 %v715
    %v779 = vpop.xlane.xlu0 %778
    %780 = vadd.xlane.f32.xlu0 %v717
    %v781 = vpop.xlane.xlu0 %780
    %782 = vadd.xlane.f32.xlu0 %v719
    %v783 = vpop.xlane.xlu0 %782
    %784 = vadd.xlane.f32.xlu0 %v721
    %v785 = vpop.xlane.xlu0 %784
    %786 = vadd.xlane.f32.xlu0 %v723
    %v787 = vpop.xlane.xlu0 %786
    %788 = vadd.xlane.f32.xlu0 %v725
    %v789 = vpop.xlane.xlu0 %788
    %790 = vadd.xlane.f32.xlu0 %v727
    %v791 = vpop.xlane.xlu0 %790
    %792 = vadd.xlane.f32.xlu0 %v729
    %v793 = vpop.xlane.xlu0 %792
    %794 = vadd.xlane.f32.xlu0 %v731
    %v795 = vpop.xlane.xlu0 %794
    %v796 = vrcp.pop %v733
    %v797 = vrcp.pop %v735
    %v798 = vrcp.pop %v737
    %v799 = vrcp.pop %v739
    %v800 = vrcp.pop %v741
    %v801 = vrcp.pop %v743
    %v802 = vrcp.pop %v745
    %v803 = vrcp.pop %v747
    %v804 = vrcp.pop %v749
    %v805 = vrcp.pop %v751
    %v806 = vrcp.pop %v753
    %v807 = vrcp.pop %v755
    %v808 = vrcp.pop %v757
    %v809 = vrcp.pop %v759
    %v810 = vrcp.pop %v761
    %v811 = vrcp.pop %v763
    %v812 = vrcp.pop %v765
    %v813 = vrcp.pop %v767
    %v814 = vrcp.pop %v769
    %v815 = vrcp.pop %v771
    %v816 = vrcp.pop %v773
    %v817 = vrcp.pop %v775
    %v818 = vrcp.pop %v777
    %v819 = vrcp.pop %v779
    %v820 = vrcp.pop %v781
    %v821 = vrcp.pop %v783
    %v822 = vrcp.pop %v785
    %v823 = vrcp.pop %v787
    %v824 = vrcp.pop %v789
    %v825 = vrcp.pop %v791
    %v826 = vrcp.pop %v793
    %v827 = vrcp.pop %v795
    %v828 = vmul.f32 %v669, %v796
    %v829 = vmul.f32 %v671, %v797
    %v830 = vmul.f32 %v673, %v798
    %v831 = vmul.f32 %v675, %v799
    %v832 = vmul.f32 %v677, %v800
    %v833 = vmul.f32 %v679, %v801
    %v834 = vmul.f32 %v681, %v802
    %v835 = vmul.f32 %v683, %v803
    %v836 = vmul.f32 %v685, %v804
    %v837 = vmul.f32 %v687, %v805
    %v838 = vmul.f32 %v689, %v806
    %v839 = vmul.f32 %v691, %v807
    %v840 = vmul.f32 %v693, %v808
    %v841 = vmul.f32 %v695, %v809
    %v842 = vmul.f32 %v697, %v810
    %v843 = vmul.f32 %v699, %v811
    %v844 = vmul.f32 %v701, %v812
    %v845 = vmul.f32 %v703, %v813
    %v846 = vmul.f32 %v705, %v814
    %v847 = vmul.f32 %v707, %v815
    %v848 = vmul.f32 %v709, %v816
    %v849 = vmul.f32 %v711, %v817
    %v850 = vmul.f32 %v713, %v818
    %v851 = vmul.f32 %v715, %v819
    %v852 = vmul.f32 %v717, %v820
    %v853 = vmul.f32 %v719, %v821
    %v854 = vmul.f32 %v721, %v822
    %v855 = vmul.f32 %v723, %v823
    %v856 = vmul.f32 %v725, %v824
    %v857 = vmul.f32 %v727, %v825
    %v858 = vmul.f32 %v729, %v826
    %v859 = vmul.f32 %v731, %v827
    %860 = vst [vmem:[#allocation2] sm:$0xff] %v828
    %861 = vst [vmem:[#allocation2 + $0x8] sm:$0xff] %v829
    %862 = vst [vmem:[#allocation2 + $0x10] sm:$0xff] %v830
    %863 = vst [vmem:[#allocation2 + $0x18] sm:$0xff] %v831
    %864 = vst [vmem:[#allocation2 + $0x20] sm:$0xff] %v832
    %865 = vst [vmem:[#allocation2 + $0x28] sm:$0xff] %v833
    %866 = vst [vmem:[#allocation2 + $0x30] sm:$0xff] %v834
    %867 = vst [vmem:[#allocation2 + $0x38] sm:$0xff] %v835
    %868 = vst [vmem:[#allocation2 + $0x40] sm:$0xff] %v836
    %869 = vst [vmem:[#allocation2 + $0x48] sm:$0xff] %v837
    %870 = vst [vmem:[#allocation2 + $0x50] sm:$0xff] %v838
    %871 = vst [vmem:[#allocation2 + $0x58] sm:$0xff] %v839
    %872 = vst [vmem:[#allocation2 + $0x60] sm:$0xff] %v840
    %873 = vst [vmem:[#allocation2 + $0x68] sm:$0xff] %v841
    %874 = vst [vmem:[#allocation2 + $0x70] sm:$0xff] %v842
    %875 = vst [vmem:[#allocation2 + $0x78] sm:$0xff] %v843
    %876 = vst [vmem:[#allocation2 + $0x80] sm:$0xff] %v844
    %877 = vst [vmem:[#allocation2 + $0x88] sm:$0xff] %v845
    %878 = vst [vmem:[#allocation2 + $0x90] sm:$0xff] %v846
    %879 = vst [vmem:[#allocation2 + $0x98] sm:$0xff] %v847
    %880 = vst [vmem:[#allocation2 + $0xa0] sm:$0xff] %v848
    %881 = vst [vmem:[#allocation2 + $0xa8] sm:$0xff] %v849
    %882 = vst [vmem:[#allocation2 + $0xb0] sm:$0xff] %v850
    %883 = vst [vmem:[#allocation2 + $0xb8] sm:$0xff] %v851
    %884 = vst [vmem:[#allocation2 + $0xc0] sm:$0xff] %v852
    %885 = vst [vmem:[#allocation2 + $0xc8] sm:$0xff] %v853
    %886 = vst [vmem:[#allocation2 + $0xd0] sm:$0xff] %v854
    %887 = vst [vmem:[#allocation2 + $0xd8] sm:$0xff] %v855
    %888 = vst [vmem:[#allocation2 + $0xe0] sm:$0xff] %v856
    %889 = vst [vmem:[#allocation2 + $0xe8] sm:$0xff] %v857
    %890 = vst [vmem:[#allocation2 + $0xf0] sm:$0xff] %v858
    %891 = vst [vmem:[#allocation2 + $0xf8] sm:$0xff] %v859
    // Predicated region
    $region22: #{tpu_custom_call.1} parent=1 // pred_check
      _
    $region23: #{tpu_custom_call.1} parent=1 // pred_check_branch
      %893 = sbr.rel (0) target = $region25
    $region24: #{tpu_custom_call.1} parent=1 // pred_region
      %s895 = ssub.s32 4096, 4096
      %896 = vsyncadd [#allocation3], %s895
      %s897 = sshll.u32 [#allocation2], 4
      %s898 = int_to_ptr.vmem [resolvable:$true] %s897
      %903 = dma.vmem_to_hbm [thread:$0]  %s898, 4096, %s5, [#allocation3], 128, 128, 8
    $region25: #{tpu_custom_call.1} parent=1 // pred_fallthru
      _
    // Predicated region
    $region26: #{tpu_custom_call.1} parent=1 // pred_check
      _
    $region27: #{tpu_custom_call.1} parent=1 // pred_check_branch
      %905 = sbr.rel (0) target = $region29
    $region28: #{tpu_custom_call.1} parent=1 // pred_region
      %906 = dma.done [#allocation3], 4096
    $region29: #{tpu_custom_call.1} parent=1 // pred_fallthru
      _
    %907 = vsyncpa [#allocation3], 1

</llo_original>
